<compile_context>
chip_gen: v6e
topology: v6e:2x2x1
jax: 0.10.0
libtpu: 0.0.40
codegen_flags: <defaults>
</compile_context>

<pallas_src>
import functools

import jax
import jax.numpy as jnp
from jax.experimental import pallas as pl
from jax.experimental.pallas import tpu as pltpu

_LANE = 128
_MAX_BLOCK_ROWS_F32 = 8192          # 8192 x 128 x 4B = 4 MiB per input tile
_SMALL_INPUT_BYTES = 2 << 20        # below this, plain JAX beats a kernel launch


def _num_tensorcores() -> int:
    """Best-effort count of TensorCores per device (2 on v7x/v4/v5p, else 1)."""
    try:
        dev = jax.devices()[0]
        if getattr(dev, "platform", "") != "tpu":
            return 1
        kind = (getattr(dev, "device_kind", "") or "").lower()
        if ("v7" in kind) or ("v4" in kind) or ("v5p" in kind):
            return 2
    except Exception:
        pass
    return 1


def _l1_partial_kernel(gen_ref, tgt_ref, out_ref, acc_ref, *,
                       block_rows, blocks_per_chunk, nrows, needs_mask):
    c = pl.program_id(0)   # chunk (parallel)
    i = pl.program_id(1)   # block within chunk (reduction, last grid axis)

    @pl.when(i == 0)
    def _():
        acc_ref[...] = jnp.zeros_like(acc_ref)

    diff = jnp.abs(tgt_ref[...].astype(jnp.float32)
                   - gen_ref[...].astype(jnp.float32))

    if needs_mask:
        # Zero rows past the true end of the data (partial / clamped overflow
        # blocks load unspecified garbage, possibly NaN/Inf; jnp.where selects,
        # so the garbage never propagates). Static flag -> compiled in only
        # when a partial block can exist. Cheap VPU filler under the DMA.
        logical_block = c * blocks_per_chunk + i
        row = (logical_block * block_rows
               + jax.lax.broadcasted_iota(jnp.int32, diff.shape, 0))
        diff = jnp.where(row < nrows, diff, 0.0)

    # Fold the (block_rows, 128) tile onto a single (8, 128) resident vreg
    # tile: pure cross-vreg VPU adds, no XLU, no full-tile VMEM store.
    acc_ref[...] += diff.reshape(-1, 8, _LANE).sum(axis=0)

    @pl.when(i == pl.num_programs(1) - 1)
    def _():
        out_ref[0, 0] = jnp.sum(acc_ref[...])


def _l1_sum(gen2d, tgt2d):
    """Sum of |tgt - gen| over a lane-dense (nrows, 128) slab, in float32."""
    nrows, ncols = gen2d.shape
    assert ncols == _LANE

    itemsize = jnp.dtype(gen2d.dtype).itemsize
    if itemsize == 2:
        # 16-bit dtypes pack two rows per sublane: (16, 128) native tile.
        align, max_rows = 16, 2 * _MAX_BLOCK_ROWS_F32
    else:
        align, max_rows = 8, _MAX_BLOCK_ROWS_F32

    block_rows = min(max_rows, ((nrows + align - 1) // align) * align)
    nblocks = pl.cdiv(nrows, block_rows)

    # 2-way chunking only pays off with >1 block and >1 TensorCore.
    num_chunks = _num_tensorcores() if nblocks > 1 else 1
    blocks_per_chunk = pl.cdiv(nblocks, num_chunks)
    needs_mask = (nrows % block_rows != 0) or (num_chunks * blocks_per_chunk != nblocks)
    last_block = nblocks - 1

    def in_map(c, i):
        # Clamp so overflow iterations re-read a valid block; their rows are
        # fully masked in-kernel, contributing exactly zero.
        return (jnp.minimum(c * blocks_per_chunk + i, last_block), 0)

    kernel = functools.partial(
        _l1_partial_kernel,
        block_rows=block_rows,
        blocks_per_chunk=blocks_per_chunk,
        nrows=nrows,
        needs_mask=needs_mask,
    )

    # 2 inputs x 2 pipeline buffers x tile, plus headroom; explicit limit so
    # the 4 MiB tiles survive v5e's 16 MiB scoped-VMEM default.
    tile_bytes = block_rows * _LANE * itemsize
    vmem_limit = min(max(2 * 2 * tile_bytes + (4 << 20), 16 << 20), 32 << 20)

    partials = pl.pallas_call(
        kernel,
        out_shape=jax.ShapeDtypeStruct((num_chunks, 1), jnp.float32),
        grid_spec=pltpu.PrefetchScalarGridSpec(
            num_scalar_prefetch=0,
            grid=(num_chunks, blocks_per_chunk),
            in_specs=[
                pl.BlockSpec((block_rows, _LANE), in_map),
                pl.BlockSpec((block_rows, _LANE), in_map),
            ],
            out_specs=pl.BlockSpec((1, 1), lambda c, i: (c, 0),
                                   memory_space=pltpu.SMEM),
            scratch_shapes=[pltpu.VMEM((8, _LANE), jnp.float32)],
        ),
        compiler_params=pltpu.CompilerParams(
            dimension_semantics=("parallel", "arbitrary"),
            vmem_limit_bytes=vmem_limit),
    )(gen2d, tgt2d)

    return jnp.sum(partials)


@functools.partial(jax.jit, static_argnames=("mel_scale", "force_pallas"))
def mel_loss(mel_gen, mel_target, mel_scale=45.0, force_pallas=False):
    """JAX/Pallas equivalent of MelLoss.forward: mel_scale * L1(mel_target, mel_gen)."""
    assert mel_gen.shape == mel_target.shape
    n_elems = mel_gen.size
    in_bytes = n_elems * jnp.dtype(mel_gen.dtype).itemsize

    if (not force_pallas) and in_bytes < _SMALL_INPUT_BYTES:
        # Launch + grid overhead dominates at these sizes; XLA's fused reduce wins.
        diff = jnp.abs(mel_target.astype(jnp.float32) - mel_gen.astype(jnp.float32))
        return jnp.float32(mel_scale) * jnp.mean(diff)

    flat_gen = mel_gen.reshape(-1)
    flat_tgt = mel_target.reshape(-1)

    n_bulk = (n_elems // _LANE) * _LANE
    abs_sum = jnp.float32(0.0)

    if n_bulk:
        nrows = n_bulk // _LANE
        gen2d = flat_gen[:n_bulk].reshape(nrows, _LANE)
        tgt2d = flat_tgt[:n_bulk].reshape(nrows, _LANE)
        abs_sum = abs_sum + _l1_sum(gen2d, tgt2d)

    if n_bulk != n_elems:
        # <=127-element tail in plain JAX (avoids full-array pad copies of both inputs).
        tail = jnp.abs(flat_tgt[n_bulk:].astype(jnp.float32)
                       - flat_gen[n_bulk:].astype(jnp.float32))
        abs_sum = abs_sum + jnp.sum(tail)

    mean_l1 = abs_sum / jnp.float32(n_elems)
    # Always return float32 (avoids bf16 downcast of the scalar loss).
    return jnp.float32(mel_scale) * mean_l1


if __name__ == "__main__":
    key = jax.random.PRNGKey(0)
    k1, k2, k3, k4 = jax.random.split(key, 4)

    mel_scale = 45.0  # deterministic "parameter" from __init__

    def ref(g, t):
        return mel_scale * jnp.mean(jnp.abs(t.astype(jnp.float32) - g.astype(jnp.float32)))

    # Small mel-spectrogram-like shapes: batch=2, n_mels=8, frames=96.
    B, M, T = 2, 8, 96
    mel_gen = jax.random.normal(k1, (B, M, T), dtype=jnp.float32)
    mel_target = jax.random.normal(k2, (B, M, T), dtype=jnp.float32)

    # 1) Pallas kernel path (forced; lane-aligned element count).
    out = jax.block_until_ready(
        mel_loss(mel_gen, mel_target, mel_scale=mel_scale, force_pallas=True))
    assert jnp.allclose(out, ref(mel_gen, mel_target), rtol=1e-5, atol=1e-5), (
        out, ref(mel_gen, mel_target))

    # 2) Pallas kernel path with a non-lane-aligned element count (bulk + JAX tail).
    gen_odd = jax.random.normal(k3, (B, M, T - 1), dtype=jnp.float32)
    tgt_odd = jax.random.normal(k4, (B, M, T - 1), dtype=jnp.float32)
    out_odd = jax.block_until_ready(
        mel_loss(gen_odd, tgt_odd, mel_scale=mel_scale, force_pallas=True))
    assert jnp.allclose(out_odd, ref(gen_odd, tgt_odd), rtol=1e-5, atol=1e-5), (
        out_odd, ref(gen_odd, tgt_odd))

    # 3) bf16 inputs through the kernel (16-row-aligned block, f32 accumulation).
    gen_bf = mel_gen.astype(jnp.bfloat16)
    tgt_bf = mel_target.astype(jnp.bfloat16)
    out_bf = jax.block_until_ready(
        mel_loss(gen_bf, tgt_bf, mel_scale=mel_scale, force_pallas=True))
    assert jnp.allclose(out_bf, ref(gen_bf, tgt_bf), rtol=1e-5, atol=1e-5), (
        out_bf, ref(gen_bf, tgt_bf))

    # 4) Auto path: small input takes the plain-JAX fast path.
    out_auto = jax.block_until_ready(mel_loss(mel_gen, mel_target, mel_scale=mel_scale))
    assert jnp.allclose(out_auto, ref(mel_gen, mel_target), rtol=1e-6, atol=1e-6), (
        out_auto, ref(mel_gen, mel_target))

    print("KERNEL_OK")
</pallas_src>

<mosaic_0001>
module attributes {stable_mosaic.version = 11 : i64} {
  func.func @_l1_partial_kernel(%arg0: i32, %arg1: i32, %arg2: memref<16x128xf32, #tpu.memory_space<vmem>>, %arg3: memref<16x128xf32, #tpu.memory_space<vmem>>, %arg4: memref<1x1xf32, #tpu.memory_space<smem>>, %arg5: memref<8x128xf32, #tpu.memory_space<vmem>>) attributes {dimension_semantics = [#tpu.dimension_semantics<parallel>, #tpu.dimension_semantics<arbitrary>], iteration_bounds = array<i64: 1, 1>, scalar_prefetch = 0 : i64, scratch_operands = 1 : i64, tpu.core_type = #tpu.core_type<tc>, window_params = [{transform_indices = @transform_0, window_bounds = array<i64: 16, 128>}, {transform_indices = @transform_1, window_bounds = array<i64: 16, 128>}, {transform_indices = @transform_2, window_bounds = array<i64: 1, 1>}]} {
    %c0_i32 = arith.constant 0 : i32
    %0 = arith.cmpi eq, %arg1, %c0_i32 : i32
    %1 = arith.extui %0 : i1 to i32
    %c0_i32_0 = arith.constant 0 : i32
    %2 = arith.cmpi ne, %1, %c0_i32_0 : i32
    scf.if %2 {
      %cst_11 = arith.constant 0.000000e+00 : f32
      %25 = vector.broadcast %cst_11 : f32 to vector<8x128xf32>
      %c0_12 = arith.constant 0 : index
      %c0_13 = arith.constant 0 : index
      %26 = vector.load %arg5[%c0_12, %c0_13] : memref<8x128xf32, #tpu.memory_space<vmem>>, vector<8x128xf32>
      tpu.vector_store %arg5[%c0_12, %c0_13], %25 {strides = array<i32>} : memref<8x128xf32, #tpu.memory_space<vmem>>, vector<8x128xf32>,
    } else {
    }
    %c0 = arith.constant 0 : index
    %c0_1 = arith.constant 0 : index
    %3 = vector.load %arg3[%c0, %c0_1] : memref<16x128xf32, #tpu.memory_space<vmem>>, vector<16x128xf32>
    %c0_2 = arith.constant 0 : index
    %c0_3 = arith.constant 0 : index
    %4 = vector.load %arg2[%c0_2, %c0_3] : memref<16x128xf32, #tpu.memory_space<vmem>>, vector<16x128xf32>
    %5 = arith.subf %3, %4 : vector<16x128xf32>
    %6 = math.absf %5 : vector<16x128xf32>
    %c1_i32 = arith.constant 1 : i32
    %7 = arith.muli %arg0, %c1_i32 : i32
    %8 = arith.addi %7, %arg1 : i32
    %c16_i32 = arith.constant 16 : i32
    %9 = arith.muli %8, %c16_i32 : i32
    %10 = tpu.iota {dimensions = array<i32: 0>} : vector<16x128xi32>
    %11 = vector.broadcast %9 : i32 to vector<16x128xi32>
    %12 = arith.addi %11, %10 : vector<16x128xi32>
    %c12_i32 = arith.constant 12 : i32
    %13 = vector.broadcast %c12_i32 : i32 to vector<16x128xi32>
    %14 = arith.cmpi slt, %12, %13 : vector<16x128xi32>
    %cst = arith.constant 0.000000e+00 : f32
    %15 = vector.broadcast %cst : f32 to vector<16x128xf32>
    %16 = arith.select %14, %6, %15 : vector<16x128xi1>, vector<16x128xf32>
    %c0_4 = arith.constant 0 : index
    %c0_5 = arith.constant 0 : index
    %17 = vector.load %arg5[%c0_4, %c0_5] : memref<8x128xf32, #tpu.memory_space<vmem>>, vector<8x128xf32>
    %18 = vector.shape_cast %16 : vector<16x128xf32> to vector<2x8x128xf32>
    %cst_6 = arith.constant dense<0.000000e+00> : vector<8x128xf32>
    %19 = vector.multi_reduction <add>, %18, %cst_6 [0] : vector<2x8x128xf32> to vector<8x128xf32>
    %20 = arith.addf %17, %19 : vector<8x128xf32>
    %c0_7 = arith.constant 0 : index
    %c0_8 = arith.constant 0 : index
    %21 = vector.load %arg5[%c0_7, %c0_8] : memref<8x128xf32, #tpu.memory_space<vmem>>, vector<8x128xf32>
    tpu.vector_store %arg5[%c0_7, %c0_8], %20 {strides = array<i32>} : memref<8x128xf32, #tpu.memory_space<vmem>>, vector<8x128xf32>,
    %c0_i32_9 = arith.constant 0 : i32
    %22 = arith.cmpi eq, %arg1, %c0_i32_9 : i32
    %23 = arith.extui %22 : i1 to i32
    %c0_i32_10 = arith.constant 0 : i32
    %24 = arith.cmpi ne, %23, %c0_i32_10 : i32
    scf.if %24 {
      %c0_11 = arith.constant 0 : index
      %c0_12 = arith.constant 0 : index
      %25 = vector.load %arg5[%c0_11, %c0_12] : memref<8x128xf32, #tpu.memory_space<vmem>>, vector<8x128xf32>
      %26 = vector.shape_cast %25 : vector<8x128xf32> to vector<1x8x128xf32>
      %cst_13 = arith.constant dense<0.000000e+00> : vector<1xf32>
      %27 = vector.multi_reduction <add>, %26, %cst_13 [1, 2] : vector<1x8x128xf32> to vector<1xf32>
      %28 = vector.shape_cast %27 : vector<1xf32> to vector<1x1x1xf32>
      %29 = vector.extract %28[0, 0, 0] : f32 from vector<1x1x1xf32>
      %c0_14 = arith.constant 0 : index
      %c0_15 = arith.constant 0 : index
      %30 = memref.load %arg4[%c0_14, %c0_15] : memref<1x1xf32, #tpu.memory_space<smem>>
      memref.store %29, %arg4[%c0_14, %c0_15] : memref<1x1xf32, #tpu.memory_space<smem>>
    } else {
    }
    return
  }
  func.func @transform_0(%arg0: i32, %arg1: i32) -> (i32, i32) {
    %c1_i32 = arith.constant 1 : i32
    %0 = arith.muli %arg0, %c1_i32 : i32
    %1 = arith.addi %0, %arg1 : i32
    %c0_i32 = arith.constant 0 : i32
    %2 = arith.minsi %1, %c0_i32 : i32
    %c0_i32_0 = arith.constant 0 : i32
    %c0_i32_1 = arith.constant 0 : i32
    return %2, %c0_i32_0 : i32, i32
  }
  func.func @transform_1(%arg0: i32, %arg1: i32) -> (i32, i32) {
    %c1_i32 = arith.constant 1 : i32
    %0 = arith.muli %arg0, %c1_i32 : i32
    %1 = arith.addi %0, %arg1 : i32
    %c0_i32 = arith.constant 0 : i32
    %2 = arith.minsi %1, %c0_i32 : i32
    %c0_i32_0 = arith.constant 0 : i32
    %c0_i32_1 = arith.constant 0 : i32
    return %2, %c0_i32_0 : i32, i32
  }
  func.func @transform_2(%arg0: i32, %arg1: i32) -> (i32, i32) {
    %c0_i32 = arith.constant 0 : i32
    %c0_i32_0 = arith.constant 0 : i32
    return %arg0, %c0_i32 : i32, i32
  }
}

</mosaic_0001>

<llo_original>
// kernel: mel_loss.1
$region0: #{mel_loss.1}
  #allocation0 [shape = 'u32[]', space=smem, size = 0x4, offset = 0x4, fixed_abs, tag = 'smem constant byte address 0x4 - core index']
  #allocation1 [shape = 'u32[144,128]{1,0:T(1,128)}', space=vmem, size = 0x12000, scoped, tag = 'internal scratch']
  #allocation2 [shape = 'f32[8,128]{1,0:T(8,128)}', space=vmem, size = 0x1000, scoped, tag = 'scratch operand']
  %s0 = inlined_call_operand.vmem [shape: f32[12,128], index: 0, kind: input, shape index: {}]
  %s1 = inlined_call_operand.vmem [shape: f32[12,128], index: 1, kind: input, shape index: {}]
  %s2 = inlined_call_operand.hbm [shape: f32[1,1], index: 2, kind: output, shape index: {}]
  %s3 = sld [smem:[#allocation0]]
  $region26: #{mel_loss.1} parent=0
    _
  %s5 = ssub.s32 1, %s3
  %s6 = scalar_select 0, %s5, %s3
  $region1: #{mel_loss.1} parent=0
    #allocation3 [shape = 'u8[512]{0}', space=smem, size = 0x200, scoped, tag = 'output window, operand 0, single buffered']
    #allocation4 [shape = 's32[1]{0}', space=sflag, size = 0x4, scoped, tag = 'scoped memory for mel_loss.1']
    %7 = vsyncpa [#allocation4], 0
    // Predicated region
    $region2: #{mel_loss.1} parent=1 // pred_check
      _
    $region3: #{mel_loss.1} parent=1 // pred_check_branch
      %9 = sbr.rel (0) target = $region5
    $region4: #{mel_loss.1} parent=1 // pred_region
      %s10 = sadd.s32 0, 0
      %p11 = scmp.lt.s32.totalorder %s10, 0
      %s12 = scalar_select %p11, %s10, 0
      %s13 = smul.u32 2, %s12
      %p14 = scmp.lt.s32.totalorder %s13, 1
      %s15 = scalar_select %p14, %s13, 1
      %s16 = smul.addr %s15, 8
      %s17 = scalar_lea.vmem %s0, %s16
      %s18 = sadd.s32 0, 0
      %p19 = scmp.lt.s32.totalorder %s18, 0
      %s20 = scalar_select %p19, %s18, 0
      %s21 = smul.u32 2, %s20
    $region5: #{mel_loss.1} parent=1 // pred_fallthru
      _
    // Predicated region
    $region6: #{mel_loss.1} parent=1 // pred_check
      _
    $region7: #{mel_loss.1} parent=1 // pred_check_branch
      %23 = sbr.rel (0) target = $region9
    $region8: #{mel_loss.1} parent=1 // pred_region
      %s24 = sadd.s32 0, 0
      %p25 = scmp.lt.s32.totalorder %s24, 0
      %s26 = scalar_select %p25, %s24, 0
      %s27 = smul.u32 2, %s26
      %p28 = scmp.lt.s32.totalorder %s27, 1
      %s29 = scalar_select %p28, %s27, 1
      %s30 = smul.addr %s29, 8
      %s31 = scalar_lea.vmem %s1, %s30
      %s32 = sadd.s32 0, 0
      %p33 = scmp.lt.s32.totalorder %s32, 0
      %s34 = scalar_select %p33, %s32, 0
      %s35 = smul.u32 2, %s34
    $region9: #{mel_loss.1} parent=1 // pred_fallthru
      _
    %s36 = sadd.s32 0, 0
    %p37 = scmp.lt.s32.totalorder %s36, 0
    %s38 = scalar_select %p37, %s36, 0
    %s39 = smul.u32 2, %s38
    %p40 = scmp.lt.s32.totalorder %s39, 1
    %s41 = scalar_select %p40, %s39, 1
    %s42 = smul.addr %s41, 8
    %s43 = scalar_lea.vmem %s0, %s42
    %s44 = sadd.s32 0, 0
    %p45 = scmp.lt.s32.totalorder %s44, 0
    %s46 = scalar_select %p45, %s44, 0
    %s47 = smul.u32 2, %s46
    %p48 = scmp.lt.s32.totalorder %s47, 1
    %s49 = scalar_select %p48, %s47, 1
    %s50 = smul.addr %s49, 8
    %s51 = scalar_lea.vmem %s1, %s50
    %s52 = sadd.s32 0, 0
    %p53 = scmp.lt.s32.totalorder %s52, 0
    %s54 = scalar_select %p53, %s52, 0
    %s55 = smul.u32 2, %s54
    %p56 = scmp.lt.s32.totalorder %s55, 1
    %s57 = scalar_select %p56, %s55, 1
    %s58 = smul.addr %s57, 8
    %s59 = scalar_lea.vmem %s0, %s58
    %s60 = sadd.s32 0, 0
    %p61 = scmp.lt.s32.totalorder %s60, 0
    %s62 = scalar_select %p61, %s60, 0
    %s63 = smul.u32 2, %s62
    %s64 = sadd.s32 0, 0
    %p65 = scmp.lt.s32.totalorder %s64, 0
    %s66 = scalar_select %p65, %s64, 0
    %s67 = smul.u32 2, %s66
    %p68 = scmp.lt.s32.totalorder %s67, 1
    %s69 = scalar_select %p68, %s67, 1
    %s70 = smul.addr %s69, 8
    %s71 = scalar_lea.vmem %s1, %s70
    %s72 = sadd.s32 0, 0
    %p73 = scmp.lt.s32.totalorder %s72, 0
    %s74 = scalar_select %p73, %s72, 0
    %s75 = smul.u32 2, %s74
    %p76 = scmp.eq.s32.totalorder 0, 0
    // Predicated region
    $region10: #{mel_loss.1} parent=1 // pred_check
      %p77 = pneg %p76
    $region11: #{mel_loss.1} parent=1 // pred_check_branch
      %79 = sbr.rel (%p77) target = $region13
    $region12: #{mel_loss.1} parent=1 // pred_region
      %80 = vst [vmem:[#allocation2] sm:$0xff] 0.0
    $region13: #{mel_loss.1} parent=1 // pred_fallthru
      _
    %v81 = vld [vmem:[%s71] sm:$0xff]
    %v82 = vld [vmem:[%s71 + $0x8] sm:$0xff]
    %v83 = vld [vmem:[%s59] sm:$0xff]
    %v84 = vld [vmem:[%s59 + $0x8] sm:$0xff]
    %v85 = vsub.f32 %v81, %v83
    %v86 = vsub.f32 %v82, %v84
    %v87 = vand.u32 2147483647, %v85
    %v88 = vand.u32 2147483647, %v86
    %s89 = sadd.s32 0, 0
    %s90 = smul.u32 %s89, 16
    %v91 = vlaneseq
    %v92 = vshrl.u32 %v91, 7
    %v93 = vadd.s32 %v92, 8
    %v94 = vstv %s90
    %v95 = vadd.s32 %v94, %v92
    %v96 = vadd.s32 %v94, %v93
    %vm97 = vcmp.lt.s32.totalorder %v95, 12
    %vm98 = vcmp.lt.s32.totalorder %v96, 12
    %v99 = vsel %vm97, %v87, 0.0
    %v100 = vsel %vm98, %v88, 0.0
    %v101 = vld [vmem:[#allocation2] sm:$0xff]
    %v102 = vadd.f32 %v99, %v100
    %v103 = vadd.f32 %v101, %v102
    %104 = vst [vmem:[#allocation2] sm:$0xff] %v103
    // Predicated region
    $region14: #{mel_loss.1} parent=1 // pred_check
      %p105 = pneg %p76
    $region15: #{mel_loss.1} parent=1 // pred_check_branch
      %107 = sbr.rel (%p105) target = $region17
    $region16: #{mel_loss.1} parent=1 // pred_region
      %v108 = vld [vmem:[#allocation2] sm:$0xff]
      %109 = vadd.xlane.f32.xlu0 %v108
      %v110 = vpop.xlane.xlu0 %109
      %v111 = vrot.slane %v110, 4
      %v112 = vadd.f32 %v110, %v111
      %v113 = vrot.slane %v112, 2
      %v114 = vadd.f32 %v112, %v113
      %v115 = vrot.slane %v114, 1
      %v116 = vadd.f32 %v114, %v115
      %s117 = vtos %v116
      %s118 = scalar_lea.smem [#allocation3], 0
      %119 = sst [smem:[%s118]] %s117
    $region17: #{mel_loss.1} parent=1 // pred_fallthru
      _
    // Predicated region
    $region18: #{mel_loss.1} parent=1 // pred_check
      _
    $region19: #{mel_loss.1} parent=1 // pred_check_branch
      %121 = sbr.rel (0) target = $region21
    $region20: #{mel_loss.1} parent=1 // pred_region
      %s123 = ssub.s32 16, 16
      %124 = vsyncadd [#allocation4], %s123
      %127 = dma.smem_to_hbm [#allocation3], 16, %s2, [#allocation4]
    $region21: #{mel_loss.1} parent=1 // pred_fallthru
      _
    // Predicated region
    $region22: #{mel_loss.1} parent=1 // pred_check
      _
    $region23: #{mel_loss.1} parent=1 // pred_check_branch
      %129 = sbr.rel (0) target = $region25
    $region24: #{mel_loss.1} parent=1 // pred_region
      %130 = dma.done [#allocation4], 16
    $region25: #{mel_loss.1} parent=1 // pred_fallthru
      _
    %131 = sfence
    %132 = vsyncpa [#allocation4], 1

</llo_original>
